<compile_context>
chip_gen: v6e
topology: v6e:2x2x1
jax: 0.10.0
libtpu: 0.0.40
codegen_flags: <defaults>
</compile_context>

<pallas_src>
import functools

import jax
import jax.numpy as jnp
from jax import lax
from jax.experimental import pallas as pl
from jax.experimental.pallas import tpu as pltpu

_LANES = 128


def _neg_mean_partial_kernel(x_ref, out_ref, acc_ref, *, tr, bpc, n, acc_is_tiled):
    c = pl.program_id(0)   # core / row-range split ("parallel")
    i = pl.program_id(1)   # streaming axis within the core ("arbitrary")

    @pl.when(i == 0)
    def _init():
        acc_ref[...] = jnp.zeros_like(acc_ref)

    # Stream in native dtype, cast in-register (no host-side astype pass).
    x = x_ref[...].astype(jnp.float32)

    # Flat-index mask: zeroes the 128-lane tail pad, the garbage rows of a
    # partial boundary block, and fully out-of-range (clamped) blocks of the
    # second core.  Required for correctness (OOB regions are undefined).
    row_start = (c * bpc + i) * tr
    row_ids = lax.broadcasted_iota(jnp.int32, (tr, _LANES), 0)
    lane_ids = lax.broadcasted_iota(jnp.int32, (tr, _LANES), 1)
    flat = (row_start + row_ids) * _LANES + lane_ids
    x = jnp.where(flat < n, x, 0.0)

    if acc_is_tiled:
        # (8,128) accumulator: pure vreg-wise adds in steady state; both the
        # cross-sublane and cross-lane reduces are deferred to finalize.
        acc_ref[...] += jnp.sum(x.reshape(tr // 8, 8, _LANES), axis=0)
    else:
        # Tiny single-block fallback (tr not a multiple of 8).
        acc_ref[...] += jnp.sum(x, axis=0, keepdims=True)

    @pl.when(i == pl.num_programs(1) - 1)
    def _finalize():
        out_ref[0, 0] = jnp.sum(acc_ref[...])   # one cross-lane reduce per core


def wgan_generator_loss(critic_fake_outputs, *, block_rows=1024, input_buffers=2):
    """Pallas TPU implementation of WGANGeneratorLoss.forward (= -mean(x))."""
    scores = critic_fake_outputs.reshape(-1)          # keep native dtype
    n = scores.shape[0]
    if n == 0:
        return jnp.float32(jnp.nan)                   # torch.mean(empty) -> nan

    itemsize = jnp.dtype(scores.dtype).itemsize
    sub = max(8, 32 // max(itemsize, 1))              # f32 -> 8, bf16 -> 16, 8-bit -> 32

    # Lane-dense (rows, 128) view; pad only up to the next 128-lane boundary.
    rows = pl.cdiv(n, _LANES)
    if rows * _LANES != n:
        scores = jnp.pad(scores, (0, rows * _LANES - n))
    x = scores.reshape(rows, _LANES)

    tr = min(block_rows, rows)
    if tr < rows:                                     # multi-block: guard (8,128)/packing
        tr = max(sub, tr - (tr % sub))
    num_blocks = pl.cdiv(rows, tr)

    # Split the row range across both TensorCores (megacore); on single-core
    # chips the extra serial partial is essentially free.
    num_cores = 2 if num_blocks >= 2 else 1
    bpc = pl.cdiv(num_blocks, num_cores)              # blocks per core

    acc_is_tiled = (tr % 8) == 0
    acc_shape = (8, _LANES) if acc_is_tiled else (1, _LANES)

    def x_index_map(c, i):
        blk = c * bpc + i
        # Clamp logically-out-of-range blocks onto a valid block; their
        # contribution is zeroed by the in-kernel flat-index mask.
        return (jnp.minimum(blk, num_blocks - 1), 0)

    in_spec_kwargs = {}
    if input_buffers != 2:                            # e.g. 3 for v5e sweeps
        in_spec_kwargs["pipeline_mode"] = pl.Buffered(input_buffers)

    kernel = functools.partial(_neg_mean_partial_kernel,
                               tr=tr, bpc=bpc, n=n, acc_is_tiled=acc_is_tiled)

    partials = pl.pallas_call(
        kernel,
        out_shape=jax.ShapeDtypeStruct((num_cores, 1), jnp.float32),
        grid=(num_cores, bpc),
        in_specs=[pl.BlockSpec((tr, _LANES), x_index_map, **in_spec_kwargs)],
        out_specs=pl.BlockSpec((1, 1), lambda c, i: (c, 0),
                               memory_space=pltpu.MemorySpace.SMEM),
        scratch_shapes=[pltpu.VMEM(acc_shape, jnp.float32)],
        compiler_params=pltpu.CompilerParams(
            dimension_semantics=("parallel", "arbitrary")),
        cost_estimate=pl.CostEstimate(
            flops=num_cores * bpc * tr * _LANES,
            transcendentals=0,
            bytes_accessed=rows * _LANES * itemsize + num_cores * 4),
    )(x)

    # Combine per-core partial sums and apply -1/N.
    return -jnp.sum(partials) * jnp.float32(1.0 / n)


# ------------------------------- main ----------------------------------------
if __name__ == "__main__":
    key = jax.random.PRNGKey(0)
    k0, k1, k2 = jax.random.split(key, 3)

    # Primary case: critic scores for a small batch, shape (B, 1).
    B = 8
    critic_fake_outputs = jax.random.normal(k0, (B, 1), dtype=jnp.float32)
    loss = jax.block_until_ready(wgan_generator_loss(critic_fake_outputs))
    ref = -jnp.mean(critic_fake_outputs)
    assert jnp.allclose(loss, ref, rtol=1e-6, atol=1e-6), (loss, ref)

    # Multi-block / dual-core path with a ragged (non-multiple-of-128) length.
    x2 = jax.random.normal(k1, (3333,), dtype=jnp.float32)
    loss2 = jax.block_until_ready(wgan_generator_loss(x2, block_rows=8))
    ref2 = -jnp.mean(x2)
    assert jnp.allclose(loss2, ref2, rtol=1e-5, atol=1e-5), (loss2, ref2)

    # bf16 critic outputs: streamed in native dtype, cast in-kernel.
    x3 = jax.random.normal(k2, (1000, 5), dtype=jnp.float32).astype(jnp.bfloat16)
    loss3 = jax.block_until_ready(wgan_generator_loss(x3, block_rows=16))
    ref3 = -jnp.mean(x3.astype(jnp.float32))
    assert jnp.allclose(loss3, ref3, rtol=1e-3, atol=1e-3), (loss3, ref3)

    print("KERNEL_OK")
</pallas_src>

<mosaic_0001>
module attributes {stable_mosaic.version = 11 : i64} {
  func.func @_neg_mean_partial_kernel(%arg0: i32, %arg1: i32, %arg2: memref<1x128xf32, #tpu.memory_space<vmem>>, %arg3: memref<1x1xf32, #tpu.memory_space<smem>>, %arg4: memref<1x128xf32, #tpu.memory_space<vmem>>) attributes {dimension_semantics = [#tpu.dimension_semantics<parallel>, #tpu.dimension_semantics<arbitrary>], iteration_bounds = array<i64: 1, 1>, scalar_prefetch = 0 : i64, scratch_operands = 1 : i64, tpu.core_type = #tpu.core_type<tc>, window_params = [{transform_indices = @transform_0, window_bounds = array<i64: 1, 128>}, {transform_indices = @transform_1, window_bounds = array<i64: 1, 1>}]} {
    %c0_i32 = arith.constant 0 : i32
    %0 = arith.cmpi eq, %arg1, %c0_i32 : i32
    %1 = arith.extui %0 : i1 to i32
    %c0_i32_0 = arith.constant 0 : i32
    %2 = arith.cmpi ne, %1, %c0_i32_0 : i32
    scf.if %2 {
      %cst_10 = arith.constant 0.000000e+00 : f32
      %26 = vector.broadcast %cst_10 : f32 to vector<1x128xf32>
      %c0_11 = arith.constant 0 : index
      %c0_12 = arith.constant 0 : index
      %27 = vector.load %arg4[%c0_11, %c0_12] : memref<1x128xf32, #tpu.memory_space<vmem>>, vector<1x128xf32>
      tpu.vector_store %arg4[%c0_11, %c0_12], %26 {strides = array<i32>} : memref<1x128xf32, #tpu.memory_space<vmem>>, vector<1x128xf32>,
    } else {
    }
    %c0 = arith.constant 0 : index
    %c0_1 = arith.constant 0 : index
    %3 = vector.load %arg2[%c0, %c0_1] : memref<1x128xf32, #tpu.memory_space<vmem>>, vector<1x128xf32>
    %c1_i32 = arith.constant 1 : i32
    %4 = arith.muli %arg0, %c1_i32 : i32
    %5 = arith.addi %4, %arg1 : i32
    %c1_i32_2 = arith.constant 1 : i32
    %6 = arith.muli %5, %c1_i32_2 : i32
    %7 = tpu.iota {dimensions = array<i32: 0>} : vector<1x128xi32>
    %8 = tpu.iota {dimensions = array<i32: 1>} : vector<1x128xi32>
    %9 = vector.broadcast %6 : i32 to vector<1x128xi32>
    %10 = arith.addi %9, %7 : vector<1x128xi32>
    %c128_i32 = arith.constant 128 : i32
    %11 = vector.broadcast %c128_i32 : i32 to vector<1x128xi32>
    %12 = arith.muli %10, %11 : vector<1x128xi32>
    %13 = arith.addi %12, %8 : vector<1x128xi32>
    %c8_i32 = arith.constant 8 : i32
    %14 = vector.broadcast %c8_i32 : i32 to vector<1x128xi32>
    %15 = arith.cmpi slt, %13, %14 : vector<1x128xi32>
    %cst = arith.constant 0.000000e+00 : f32
    %16 = vector.broadcast %cst : f32 to vector<1x128xf32>
    %17 = arith.select %15, %3, %16 : vector<1x128xi1>, vector<1x128xf32>
    %c0_3 = arith.constant 0 : index
    %c0_4 = arith.constant 0 : index
    %18 = vector.load %arg4[%c0_3, %c0_4] : memref<1x128xf32, #tpu.memory_space<vmem>>, vector<1x128xf32>
    %cst_5 = arith.constant dense<0.000000e+00> : vector<128xf32>
    %19 = vector.multi_reduction <add>, %17, %cst_5 [0] : vector<1x128xf32> to vector<128xf32>
    %20 = vector.shape_cast %19 : vector<128xf32> to vector<1x128xf32>
    %21 = arith.addf %18, %20 : vector<1x128xf32>
    %c0_6 = arith.constant 0 : index
    %c0_7 = arith.constant 0 : index
    %22 = vector.load %arg4[%c0_6, %c0_7] : memref<1x128xf32, #tpu.memory_space<vmem>>, vector<1x128xf32>
    tpu.vector_store %arg4[%c0_6, %c0_7], %21 {strides = array<i32>} : memref<1x128xf32, #tpu.memory_space<vmem>>, vector<1x128xf32>,
    %c0_i32_8 = arith.constant 0 : i32
    %23 = arith.cmpi eq, %arg1, %c0_i32_8 : i32
    %24 = arith.extui %23 : i1 to i32
    %c0_i32_9 = arith.constant 0 : i32
    %25 = arith.cmpi ne, %24, %c0_i32_9 : i32
    scf.if %25 {
      %c0_10 = arith.constant 0 : index
      %c0_11 = arith.constant 0 : index
      %26 = vector.load %arg4[%c0_10, %c0_11] : memref<1x128xf32, #tpu.memory_space<vmem>>, vector<1x128xf32>
      %27 = vector.shape_cast %26 : vector<1x128xf32> to vector<1x1x128xf32>
      %cst_12 = arith.constant dense<0.000000e+00> : vector<1xf32>
      %28 = vector.multi_reduction <add>, %27, %cst_12 [1, 2] : vector<1x1x128xf32> to vector<1xf32>
      %29 = vector.shape_cast %28 : vector<1xf32> to vector<1x1x1xf32>
      %30 = vector.extract %29[0, 0, 0] : f32 from vector<1x1x1xf32>
      %c0_13 = arith.constant 0 : index
      %c0_14 = arith.constant 0 : index
      %31 = memref.load %arg3[%c0_13, %c0_14] : memref<1x1xf32, #tpu.memory_space<smem>>
      memref.store %30, %arg3[%c0_13, %c0_14] : memref<1x1xf32, #tpu.memory_space<smem>>
    } else {
    }
    return
  }
  func.func @transform_0(%arg0: i32, %arg1: i32) -> (i32, i32) {
    %c1_i32 = arith.constant 1 : i32
    %0 = arith.muli %arg0, %c1_i32 : i32
    %1 = arith.addi %0, %arg1 : i32
    %c0_i32 = arith.constant 0 : i32
    %2 = arith.minsi %1, %c0_i32 : i32
    %c0_i32_0 = arith.constant 0 : i32
    %c0_i32_1 = arith.constant 0 : i32
    return %2, %c0_i32_0 : i32, i32
  }
  func.func @transform_1(%arg0: i32, %arg1: i32) -> (i32, i32) {
    %c0_i32 = arith.constant 0 : i32
    %c0_i32_0 = arith.constant 0 : i32
    return %arg0, %c0_i32 : i32, i32
  }
}

</mosaic_0001>

<llo_original>
// kernel: tpu_custom_call.1
$region0: #{tpu_custom_call.1}
  #allocation0 [shape = 'u32[]', space=smem, size = 0x4, offset = 0x4, fixed_abs, tag = 'smem constant byte address 0x4 - core index']
  #allocation1 [shape = 'u32[144,128]{1,0:T(1,128)}', space=vmem, size = 0x12000, scoped, tag = 'internal scratch']
  #allocation2 [shape = 'f32[1,128]{1,0:T(1,128)}', space=vmem, size = 0x200, scoped, tag = 'scratch operand']
  %s0 = inlined_call_operand.hbm [shape: f32[1,128], index: 0, kind: input, shape index: {}]
  %s1 = inlined_call_operand.hbm [shape: f32[1,1], index: 1, kind: output, shape index: {}]
  %s2 = sld [smem:[#allocation0]]
  $region26: #{tpu_custom_call.1} parent=0
    _
  %s4 = ssub.s32 1, %s2
  %s5 = scalar_select 0, %s4, %s2
  $region1: #{tpu_custom_call.1} parent=0
    #allocation3 [shape = 'u8[512]{0}', space=vmem, size = 0x400, scoped, tag = 'input window, operand 0, single buffered']
    #allocation4 [shape = 's32[1]{0}', space=sflag, size = 0x4, scoped, tag = 'scoped memory for tpu_custom_call.1']
    #allocation5 [shape = 's32[1]{0}', space=sflag, size = 0x4, scoped, tag = 'scoped memory for tpu_custom_call.1']
    #allocation6 [shape = 'u8[512]{0}', space=smem, size = 0x200, scoped, tag = 'output window, operand 0, single buffered']
    %6 = vsyncpa [#allocation4], 0
    %7 = vsyncpa [#allocation5], 0
    // Predicated region
    $region2: #{tpu_custom_call.1} parent=1 // pred_check
      _
    $region3: #{tpu_custom_call.1} parent=1 // pred_check_branch
      %9 = sbr.rel (0) target = $region5
    $region4: #{tpu_custom_call.1} parent=1 // pred_region
      %s10 = sadd.s32 0, 0
      %p11 = scmp.lt.s32.totalorder %s10, 0
      %s12 = scalar_select %p11, %s10, 0
      %s14 = ssub.s32 16, 16
      %15 = vsyncadd [#allocation4], %s14
      %s16 = smul.addr %s12, 16
      %s17 = scalar_lea.hbm %s0, %s16
      %s19 = sshll.u32 [#allocation3], 4
      %s20 = int_to_ptr.vmem [resolvable:$true] %s19
      %22 = dma.hbm_to_vmem [thread:$0]  %s17, 16, %s20, [#allocation4]
    $region5: #{tpu_custom_call.1} parent=1 // pred_fallthru
      _
    // Predicated region
    $region6: #{tpu_custom_call.1} parent=1 // pred_check
      _
    $region7: #{tpu_custom_call.1} parent=1 // pred_check_branch
      %24 = sbr.rel (0) target = $region9
    $region8: #{tpu_custom_call.1} parent=1 // pred_region
      %25 = dma.done [#allocation4], 16
    $region9: #{tpu_custom_call.1} parent=1 // pred_fallthru
      _
    %s26 = sadd.s32 0, 0
    %p27 = scmp.lt.s32.totalorder %s26, 0
    %s28 = scalar_select %p27, %s26, 0
    %p29 = scmp.eq.s32.totalorder 0, 0
    // Predicated region
    $region10: #{tpu_custom_call.1} parent=1 // pred_check
      %p30 = pneg %p29
    $region11: #{tpu_custom_call.1} parent=1 // pred_check_branch
      %32 = sbr.rel (%p30) target = $region13
    $region12: #{tpu_custom_call.1} parent=1 // pred_region
      %33 = vst [vmem:[#allocation2] sm:$0x1] 0.0
    $region13: #{tpu_custom_call.1} parent=1 // pred_fallthru
      _
    %v34 = vld [vmem:[#allocation3] sm:$0x1]
    %s35 = sadd.s32 0, 0
    %v36 = vlaneseq
    %v37 = vshrl.u32 %v36, 7
    %v38 = vlaneseq
    %v39 = vand.u32 %v38, 127
    %v40 = vstv %s35
    %v41 = vadd.s32 %v40, %v37
    %v42 = vmul.u32 %v41, 128
    %v43 = vadd.s32 %v42, %v39
    %vm44 = vcmp.lt.s32.totalorder %v43, 8
    %v45 = vsel %vm44, %v34, 0.0
    %v46 = vld [vmem:[#allocation2] sm:$0x1]
    %v47 = vadd.f32 %v45, 0.0
    %v48 = vadd.f32 %v46, %v47
    %49 = vst [vmem:[#allocation2] sm:$0x1] %v48
    // Predicated region
    $region14: #{tpu_custom_call.1} parent=1 // pred_check
      %p50 = pneg %p29
    $region15: #{tpu_custom_call.1} parent=1 // pred_check_branch
      %52 = sbr.rel (%p50) target = $region17
    $region16: #{tpu_custom_call.1} parent=1 // pred_region
      %v53 = vld [vmem:[#allocation2] sm:$0x1]
      %vm54 = vcmask 1040384
      %v55 = vsel %vm54, %v53, 0.0
      %56 = vadd.xlane.f32.xlu0 %v55
      %v57 = vpop.xlane.xlu0 %56
      %v58 = vrot.slane %v57, 4
      %v59 = vadd.f32 %v57, %v58
      %v60 = vrot.slane %v59, 2
      %v61 = vadd.f32 %v59, %v60
      %v62 = vrot.slane %v61, 1
      %v63 = vadd.f32 %v61, %v62
      %s64 = vtos %v63
      %s65 = scalar_lea.smem [#allocation6], 0
      %66 = sst [smem:[%s65]] %s64
    $region17: #{tpu_custom_call.1} parent=1 // pred_fallthru
      _
    // Predicated region
    $region18: #{tpu_custom_call.1} parent=1 // pred_check
      _
    $region19: #{tpu_custom_call.1} parent=1 // pred_check_branch
      %68 = sbr.rel (0) target = $region21
    $region20: #{tpu_custom_call.1} parent=1 // pred_region
      %s70 = ssub.s32 16, 16
      %71 = vsyncadd [#allocation5], %s70
      %74 = dma.smem_to_hbm [#allocation6], 16, %s1, [#allocation5]
    $region21: #{tpu_custom_call.1} parent=1 // pred_fallthru
      _
    // Predicated region
    $region22: #{tpu_custom_call.1} parent=1 // pred_check
      _
    $region23: #{tpu_custom_call.1} parent=1 // pred_check_branch
      %76 = sbr.rel (0) target = $region25
    $region24: #{tpu_custom_call.1} parent=1 // pred_region
      %77 = dma.done [#allocation5], 16
    $region25: #{tpu_custom_call.1} parent=1 // pred_fallthru
      _
    %78 = sfence
    %79 = vsyncpa [#allocation4], 1
    %80 = vsyncpa [#allocation5], 1

</llo_original>
